<compile_context>
chip_gen: v5e
topology: v5e:2x2
jax: 0.10.0
libtpu: 0.0.40
codegen_flags: <defaults>
</compile_context>

<pallas_src>
import functools

import jax
import jax.numpy as jnp
from jax.experimental import pallas as pl
from jax.experimental.pallas import tpu as pltpu


def _cdiv(a, b):
    return -(-a // b)


def _round_up(x, m):
    return _cdiv(x, m) * m


def _tpu_info():
    """Returns (vmem_capacity_bytes, has_bf16_vpu)."""
    kind = ""
    try:
        kind = jax.devices()[0].device_kind.lower()
    except Exception:
        pass
    vmem = None
    try:
        vmem = getattr(pltpu.get_tpu_info(), "vmem_capacity_bytes", None)
    except Exception:
        pass
    if not vmem:
        # v7x: 64 MiB per TensorCore; v5e/v6e (and older): 128 MiB.
        vmem = 64 * 1024 * 1024 if "v7" in kind else 128 * 1024 * 1024
    # bf16 VPU lanes exist on v6e and later; v5e and older are f32-only VPU.
    old_gen = any(t in kind for t in ("v2", "v3", "v4", "v5"))
    return int(vmem), (not old_gen)


def _pick_tile_rows(M, C, Hp, itemsize, w_itemsize, sublane, vmem_cap):
    # Budget conservatively for double-buffered weights (valid whether or not
    # the pl.Buffered(1) single-buffer probe succeeds).
    weight_bytes = 2 * 2 * C * Hp * w_itemsize + 4 * (Hp + C) * 4
    budget = max(int(vmem_cap * 0.7) - weight_bytes, 2 * 1024 * 1024)
    # Per-row VMEM: x + out streams (double buffered) + f32 intermediates
    # (h: Hp, s: C, gate copy: C).
    per_row = 4 * C * itemsize + (2 * C + Hp) * 4
    rows_fit = max(budget // per_row, sublane)
    # Bytes target: ~4 MiB of x per grid step amortizes the ~0.35 us/step
    # overhead without hogging VMEM (matters most on v7x's 64 MiB).
    rows_target = max((4 * 1024 * 1024) // max(C * itemsize, 1), sublane)
    rows = min(rows_fit, rows_target)
    if rows >= M:
        rows = M
    else:
        # Split rows evenly over the steps so at most one short (masked) block
        # is streamed, instead of up to tile-1 rows of waste.
        rows = _cdiv(M, _cdiv(M, rows))
    return int(max(sublane, _round_up(rows, sublane)))


def _se_kernel(x_ref, w1_ref, b1_ref, w2_ref, b2_ref, o_ref, *, gate_in_input_dtype):
    # x_ref: (TM, C) tile of rows; weights are pre-transposed (and H-padded) so
    # both matmuls are plain row-major.  x's native dtype feeds the MXU.
    x = x_ref[...]

    h = jnp.dot(x, w1_ref[...], preferred_element_type=jnp.float32) + b1_ref[...]
    h = jnp.maximum(h, 0.0)                                   # ReLU, f32

    s = jnp.dot(h.astype(w2_ref.dtype), w2_ref[...],
                preferred_element_type=jnp.float32) + b2_ref[...]
    s = jax.nn.sigmoid(s)                                     # sigmoid gate (EUP), f32

    if gate_in_input_dtype:
        # v6e/v7x have bf16 VPU lanes (and this is a no-op for f32 inputs):
        # gate in x's dtype to halve vreg/VMEM pressure in the epilogue.
        o_ref[...] = (x * s.astype(x.dtype)).astype(o_ref.dtype)
    else:
        # v5e: no bf16 VPU path -- gate in f32, single cast at the store.
        o_ref[...] = (x.astype(jnp.float32) * s).astype(o_ref.dtype)


# Lazily probed: pl.Buffered(1) (single-buffered constant weight blocks) is not
# guaranteed on every jax version; cache whether it lowered successfully.
_WEIGHT_SINGLE_BUFFER_OK = None


def se_block(x, w1, b1, w2, b2, *, tile_rows=None):
    """x: (..., C). w1: (H, C), b1: (H,), w2: (C, H), b2: (C,)  (PyTorch Linear layout)."""
    orig_shape = x.shape
    C = orig_shape[-1]
    H = w1.shape[0]
    dtype = x.dtype
    itemsize = jnp.dtype(dtype).itemsize
    sublane = 16 if itemsize == 2 else 8  # 16-bit dtypes pack 2 rows per sublane

    vmem_cap, has_bf16_vpu = _tpu_info()

    # x / out are streamed unpadded; only the hidden dim is padded (exact).
    x2d = x.reshape(-1, C)
    M = x2d.shape[0]
    Hp = _round_up(H, 128)

    # Both matmuls run in x's dtype (bf16 stays on the fast MXU path and halves
    # resident weight VMEM + weight DMA); biases and accumulation stay f32.
    cdt = dtype if itemsize < 4 else jnp.float32
    w_itemsize = jnp.dtype(cdt).itemsize
    w1t = jnp.pad(w1.T.astype(cdt), ((0, 0), (0, Hp - H)))                 # (C, Hp)
    w2t = jnp.pad(w2.T.astype(cdt), ((0, Hp - H), (0, 0)))                 # (Hp, C)
    b1r = jnp.pad(b1.astype(jnp.float32), (0, Hp - H)).reshape(1, Hp)      # (1, Hp)
    b2r = b2.astype(jnp.float32).reshape(1, C)                             # (1, C)

    tile = tile_rows if tile_rows is not None else _pick_tile_rows(
        M, C, Hp, itemsize, w_itemsize, sublane, vmem_cap)
    grid = (_cdiv(M, tile),)  # partial last block: OOB rows are masked on store

    gate_in_input_dtype = (itemsize >= 4) or has_bf16_vpu
    kernel = functools.partial(_se_kernel, gate_in_input_dtype=gate_in_input_dtype)

    vmem_needed = (4 * tile * C * itemsize            # x + out tiles, double-buffered
                   + 2 * 2 * C * Hp * w_itemsize      # resident weights (<= 2 bufs)
                   + tile * (2 * C + Hp) * 4          # f32 intermediates (h, s, gate)
                   + 4 * (Hp + C) * 4)                # biases
    vmem_limit = int(min(int(vmem_cap * 0.85),
                         max(vmem_needed + vmem_needed // 2, 32 * 1024 * 1024)))
    # TODO(synk): if 2*C*Hp*w_itemsize exceeds ~1/3 of VMEM (very large C on v7x),
    # add a second "arbitrary" grid axis over Hp with an f32 accumulator instead
    # of keeping the weights fully VMEM-resident.

    cost = pl.CostEstimate(
        flops=4 * M * C * Hp + 3 * M * C,             # two matmuls + gate math
        transcendentals=M * C,                        # sigmoid
        bytes_accessed=2 * M * C * itemsize + 2 * C * Hp * w_itemsize + (Hp + C) * 4,
    )

    def _call(single_buffer_weights):
        wkw = {"pipeline_mode": pl.Buffered(1)} if single_buffer_weights else {}
        return pl.pallas_call(
            kernel,
            out_shape=jax.ShapeDtypeStruct((M, C), dtype),
            grid_spec=pltpu.PrefetchScalarGridSpec(
                num_scalar_prefetch=0,
                grid=grid,
                in_specs=[
                    pl.BlockSpec((tile, C), lambda i: (i, 0)),        # streamed x rows
                    # Constant index_maps: fetched once, VMEM-resident for the
                    # whole grid (no per-step re-DMA).
                    pl.BlockSpec((C, Hp), lambda i: (0, 0), **wkw),   # W1.T
                    pl.BlockSpec((1, Hp), lambda i: (0, 0), **wkw),   # b1
                    pl.BlockSpec((Hp, C), lambda i: (0, 0), **wkw),   # W2.T
                    pl.BlockSpec((1, C), lambda i: (0, 0), **wkw),    # b2
                ],
                out_specs=pl.BlockSpec((tile, C), lambda i: (i, 0)),
            ),
            compiler_params=pltpu.CompilerParams(
                # "parallel" lets the row axis shard across v7x's 2 TensorCores
                # (no-op on single-core v5e/v6e).
                dimension_semantics=("parallel",),
                vmem_limit_bytes=vmem_limit,
            ),
            cost_estimate=cost,
        )(x2d, w1t, b1r, w2t, b2r)

    # Constant blocks never change index, so they don't need double buffering;
    # try pl.Buffered(1) (halves resident-weight VMEM) and fall back to default
    # pipelining if this jax version rejects it.  The probe only applies when
    # se_block is called eagerly (as it is here).
    global _WEIGHT_SINGLE_BUFFER_OK
    attempts = ([True, False] if _WEIGHT_SINGLE_BUFFER_OK is None
                else [_WEIGHT_SINGLE_BUFFER_OK])
    out = None
    last_err = None
    for sb in attempts:
        try:
            out = _call(sb)
            _WEIGHT_SINGLE_BUFFER_OK = sb
            last_err = None
            break
        except Exception as e:  # unsupported pipeline_mode on this jax version
            last_err = e
    if last_err is not None:
        raise last_err

    return out.reshape(orig_shape)


if __name__ == "__main__":
    key = jax.random.PRNGKey(0)
    B, S, C, r = 2, 8, 32, 8        # in_ch=32, reduction r=8 -> hidden=4
    H = C // r

    kx, kw1, kw2 = jax.random.split(key, 3)
    x = jax.random.normal(kx, (B, S, C), dtype=jnp.float32)

    # Deterministic init mirroring SEBlock.init_weights(): U(-0.1, 0.1) weights, zero biases.
    w1 = jax.random.uniform(kw1, (H, C), minval=-0.1, maxval=0.1, dtype=jnp.float32)
    b1 = jnp.zeros((H,), dtype=jnp.float32)
    w2 = jax.random.uniform(kw2, (C, H), minval=-0.1, maxval=0.1, dtype=jnp.float32)
    b2 = jnp.zeros((C,), dtype=jnp.float32)

    out = se_block(x, w1, b1, w2, b2)
    out = jax.block_until_ready(out)

    # Reference check in plain JAX (same math, no Pallas).
    h_ref = jnp.maximum(x @ w1.T + b1, 0.0)
    s_ref = jax.nn.sigmoid(h_ref @ w2.T + b2)
    ref = x * s_ref
    assert jnp.allclose(out, ref, atol=1e-5, rtol=1e-5), "mismatch vs reference"

    print("KERNEL_OK")
</pallas_src>

<mosaic_0001>
module attributes {stable_mosaic.version = 11 : i64} {
  func.func @_se_kernel(%arg0: i32, %arg1: memref<16x32xf32, #tpu.memory_space<vmem>>, %arg2: memref<32x128xf32, #tpu.memory_space<vmem>>, %arg3: memref<1x128xf32, #tpu.memory_space<vmem>>, %arg4: memref<128x32xf32, #tpu.memory_space<vmem>>, %arg5: memref<1x32xf32, #tpu.memory_space<vmem>>, %arg6: memref<16x32xf32, #tpu.memory_space<vmem>>) attributes {dimension_semantics = [#tpu.dimension_semantics<parallel>], iteration_bounds = array<i64: 1>, scalar_prefetch = 0 : i64, scratch_operands = 0 : i64, tpu.core_type = #tpu.core_type<tc>, window_params = [{transform_indices = @transform_0, window_bounds = array<i64: 16, 32>}, {pipeline_mode = #tpu.pipeline_mode<synchronous>, transform_indices = @transform_1, window_bounds = array<i64: 32, 128>}, {pipeline_mode = #tpu.pipeline_mode<synchronous>, transform_indices = @transform_2, window_bounds = array<i64: 1, 128>}, {pipeline_mode = #tpu.pipeline_mode<synchronous>, transform_indices = @transform_3, window_bounds = array<i64: 128, 32>}, {pipeline_mode = #tpu.pipeline_mode<synchronous>, transform_indices = @transform_4, window_bounds = array<i64: 1, 32>}, {transform_indices = @transform_5, window_bounds = array<i64: 16, 32>}]} {
    %c0 = arith.constant 0 : index
    %c0_0 = arith.constant 0 : index
    %0 = vector.load %arg1[%c0, %c0_0] : memref<16x32xf32, #tpu.memory_space<vmem>>, vector<16x32xf32>
    %c0_1 = arith.constant 0 : index
    %c0_2 = arith.constant 0 : index
    %1 = vector.load %arg2[%c0_1, %c0_2] : memref<32x128xf32, #tpu.memory_space<vmem>>, vector<32x128xf32>
    %cst = arith.constant dense<0.000000e+00> : vector<16x128xf32>
    %2 = tpu.matmul %0, %1, %cst {dimension_numbers = #tpu.dot_dimension_numbers<[1], [0], [0], [1], [0, 0, 1, 1], [], []>} : vector<16x32xf32>, vector<32x128xf32>, vector<16x128xf32> -> vector<16x128xf32>
    %c0_3 = arith.constant 0 : index
    %c0_4 = arith.constant 0 : index
    %3 = vector.load %arg3[%c0_3, %c0_4] : memref<1x128xf32, #tpu.memory_space<vmem>>, vector<1x128xf32>
    %4 = vector.broadcast %3 : vector<1x128xf32> to vector<16x128xf32>
    %5 = arith.addf %2, %4 : vector<16x128xf32>
    %cst_5 = arith.constant 0.000000e+00 : f32
    %6 = vector.broadcast %cst_5 : f32 to vector<16x128xf32>
    %7 = arith.maximumf %5, %6 : vector<16x128xf32>
    %c0_6 = arith.constant 0 : index
    %c0_7 = arith.constant 0 : index
    %8 = vector.load %arg4[%c0_6, %c0_7] : memref<128x32xf32, #tpu.memory_space<vmem>>, vector<128x32xf32>
    %cst_8 = arith.constant dense<0.000000e+00> : vector<16x32xf32>
    %9 = tpu.matmul %7, %8, %cst_8 {dimension_numbers = #tpu.dot_dimension_numbers<[1], [0], [0], [1], [0, 0, 1, 1], [], []>} : vector<16x128xf32>, vector<128x32xf32>, vector<16x32xf32> -> vector<16x32xf32>
    %c0_9 = arith.constant 0 : index
    %c0_10 = arith.constant 0 : index
    %10 = vector.load %arg5[%c0_9, %c0_10] : memref<1x32xf32, #tpu.memory_space<vmem>>, vector<1x32xf32>
    %11 = vector.broadcast %10 : vector<1x32xf32> to vector<16x32xf32>
    %12 = arith.addf %9, %11 : vector<16x32xf32>
    %13 = arith.negf %12 : vector<16x32xf32>
    %14 = math.exp %13 : vector<16x32xf32>
    %cst_11 = arith.constant 1.000000e+00 : f32
    %15 = vector.broadcast %cst_11 : f32 to vector<16x32xf32>
    %16 = arith.addf %15, %14 : vector<16x32xf32>
    %17 = arith.divf %15, %16 : vector<16x32xf32>
    %18 = arith.mulf %0, %17 : vector<16x32xf32>
    %c0_12 = arith.constant 0 : index
    %c0_13 = arith.constant 0 : index
    %19 = vector.load %arg6[%c0_12, %c0_13] : memref<16x32xf32, #tpu.memory_space<vmem>>, vector<16x32xf32>
    tpu.vector_store %arg6[%c0_12, %c0_13], %18 {strides = array<i32>} : memref<16x32xf32, #tpu.memory_space<vmem>>, vector<16x32xf32>,
    return
  }
  func.func @transform_0(%arg0: i32) -> (i32, i32) {
    %c0_i32 = arith.constant 0 : i32
    %c0_i32_0 = arith.constant 0 : i32
    return %arg0, %c0_i32 : i32, i32
  }
  func.func @transform_1(%arg0: i32) -> (i32, i32) {
    %c0_i32 = arith.constant 0 : i32
    %c0_i32_0 = arith.constant 0 : i32
    %c0_i32_1 = arith.constant 0 : i32
    return %c0_i32, %c0_i32_0 : i32, i32
  }
  func.func @transform_2(%arg0: i32) -> (i32, i32) {
    %c0_i32 = arith.constant 0 : i32
    %c0_i32_0 = arith.constant 0 : i32
    %c0_i32_1 = arith.constant 0 : i32
    return %c0_i32, %c0_i32_0 : i32, i32
  }
  func.func @transform_3(%arg0: i32) -> (i32, i32) {
    %c0_i32 = arith.constant 0 : i32
    %c0_i32_0 = arith.constant 0 : i32
    %c0_i32_1 = arith.constant 0 : i32
    return %c0_i32, %c0_i32_0 : i32, i32
  }
  func.func @transform_4(%arg0: i32) -> (i32, i32) {
    %c0_i32 = arith.constant 0 : i32
    %c0_i32_0 = arith.constant 0 : i32
    %c0_i32_1 = arith.constant 0 : i32
    return %c0_i32, %c0_i32_0 : i32, i32
  }
  func.func @transform_5(%arg0: i32) -> (i32, i32) {
    %c0_i32 = arith.constant 0 : i32
    %c0_i32_0 = arith.constant 0 : i32
    return %arg0, %c0_i32 : i32, i32
  }
}

module attributes {stable_mosaic.version = 11 : i64} {
  func.func @_se_kernel(%arg0: i32, %arg1: memref<16x32xf32, #tpu.memory_space<vmem>>, %arg2: memref<32x128xf32, #tpu.memory_space<vmem>>, %arg3: memref<1x128xf32, #tpu.memory_space<vmem>>, %arg4: memref<128x32xf32, #tpu.memory_space<vmem>>, %arg5: memref<1x32xf32, #tpu.memory_space<vmem>>, %arg6: memref<16x32xf32, #tpu.memory_space<vmem>>) attributes {dimension_semantics = [#tpu.dimension_semantics<parallel>], iteration_bounds = array<i64: 1>, scalar_prefetch = 0 : i64, scratch_operands = 0 : i64, tpu.core_type = #tpu.core_type<tc>, window_params = [{transform_indices = @transform_0, window_bounds = array<i64: 16, 32>}, {pipeline_mode = #tpu.pipeline_mode<synchronous>, transform_indices = @transform_1, window_bounds = array<i64: 32, 128>}, {pipeline_mode = #tpu.pipeline_mode<synchronous>, transform_indices = @transform_2, window_bounds = array<i64: 1, 128>}, {pipeline_mode = #tpu.pipeline_mode<synchronous>, transform_indices = @transform_3, window_bounds = array<i64: 128, 32>}, {pipeline_mode = #tpu.pipeline_mode<synchronous>, transform_indices = @transform_4, window_bounds = array<i64: 1, 32>}, {transform_indices = @transform_5, window_bounds = array<i64: 16, 32>}]} {
    %c0 = arith.constant 0 : index
    %c0_0 = arith.constant 0 : index
    %0 = vector.load %arg1[%c0, %c0_0] : memref<16x32xf32, #tpu.memory_space<vmem>>, vector<16x32xf32>
    %c0_1 = arith.constant 0 : index
    %c0_2 = arith.constant 0 : index
    %1 = vector.load %arg2[%c0_1, %c0_2] : memref<32x128xf32, #tpu.memory_space<vmem>>, vector<32x128xf32>
    %cst = arith.constant dense<0.000000e+00> : vector<16x128xf32>
    %2 = tpu.matmul %0, %1, %cst {dimension_numbers = #tpu.dot_dimension_numbers<[1], [0], [0], [1], [0, 0, 1, 1], [], []>} : vector<16x32xf32>, vector<32x128xf32>, vector<16x128xf32> -> vector<16x128xf32>
    %c0_3 = arith.constant 0 : index
    %c0_4 = arith.constant 0 : index
    %3 = vector.load %arg3[%c0_3, %c0_4] : memref<1x128xf32, #tpu.memory_space<vmem>>, vector<1x128xf32>
    %4 = vector.broadcast %3 : vector<1x128xf32> to vector<16x128xf32>
    %5 = arith.addf %2, %4 : vector<16x128xf32>
    %cst_5 = arith.constant 0.000000e+00 : f32
    %6 = vector.broadcast %cst_5 : f32 to vector<16x128xf32>
    %7 = arith.maximumf %5, %6 : vector<16x128xf32>
    %c0_6 = arith.constant 0 : index
    %c0_7 = arith.constant 0 : index
    %8 = vector.load %arg4[%c0_6, %c0_7] : memref<128x32xf32, #tpu.memory_space<vmem>>, vector<128x32xf32>
    %cst_8 = arith.constant dense<0.000000e+00> : vector<16x32xf32>
    %9 = tpu.matmul %7, %8, %cst_8 {dimension_numbers = #tpu.dot_dimension_numbers<[1], [0], [0], [1], [0, 0, 1, 1], [], []>} : vector<16x128xf32>, vector<128x32xf32>, vector<16x32xf32> -> vector<16x32xf32>
    %c0_9 = arith.constant 0 : index
    %c0_10 = arith.constant 0 : index
    %10 = vector.load %arg5[%c0_9, %c0_10] : memref<1x32xf32, #tpu.memory_space<vmem>>, vector<1x32xf32>
    %11 = vector.broadcast %10 : vector<1x32xf32> to vector<16x32xf32>
    %12 = arith.addf %9, %11 : vector<16x32xf32>
    %13 = arith.negf %12 : vector<16x32xf32>
    %14 = math.exp %13 : vector<16x32xf32>
    %cst_11 = arith.constant 1.000000e+00 : f32
    %15 = vector.broadcast %cst_11 : f32 to vector<16x32xf32>
    %16 = arith.addf %15, %14 : vector<16x32xf32>
    %17 = arith.divf %15, %16 : vector<16x32xf32>
    %18 = arith.mulf %0, %17 : vector<16x32xf32>
    %c0_12 = arith.constant 0 : index
    %c0_13 = arith.constant 0 : index
    %19 = vector.load %arg6[%c0_12, %c0_13] : memref<16x32xf32, #tpu.memory_space<vmem>>, vector<16x32xf32>
    tpu.vector_store %arg6[%c0_12, %c0_13], %18 {strides = array<i32>} : memref<16x32xf32, #tpu.memory_space<vmem>>, vector<16x32xf32>,
    return
  }
  func.func @transform_0(%arg0: i32) -> (i32, i32) {
    %c0_i32 = arith.constant 0 : i32
    %c0_i32_0 = arith.constant 0 : i32
    return %arg0, %c0_i32 : i32, i32
  }
  func.func @transform_1(%arg0: i32) -> (i32, i32) {
    %c0_i32 = arith.constant 0 : i32
    %c0_i32_0 = arith.constant 0 : i32
    %c0_i32_1 = arith.constant 0 : i32
    return %c0_i32, %c0_i32_0 : i32, i32
  }
  func.func @transform_2(%arg0: i32) -> (i32, i32) {
    %c0_i32 = arith.constant 0 : i32
    %c0_i32_0 = arith.constant 0 : i32
    %c0_i32_1 = arith.constant 0 : i32
    return %c0_i32, %c0_i32_0 : i32, i32
  }
  func.func @transform_3(%arg0: i32) -> (i32, i32) {
    %c0_i32 = arith.constant 0 : i32
    %c0_i32_0 = arith.constant 0 : i32
    %c0_i32_1 = arith.constant 0 : i32
    return %c0_i32, %c0_i32_0 : i32, i32
  }
  func.func @transform_4(%arg0: i32) -> (i32, i32) {
    %c0_i32 = arith.constant 0 : i32
    %c0_i32_0 = arith.constant 0 : i32
    %c0_i32_1 = arith.constant 0 : i32
    return %c0_i32, %c0_i32_0 : i32, i32
  }
  func.func @transform_5(%arg0: i32) -> (i32, i32) {
    %c0_i32 = arith.constant 0 : i32
    %c0_i32_0 = arith.constant 0 : i32
    return %arg0, %c0_i32 : i32, i32
  }
}

</mosaic_0001>

<llo_original>
// kernel: tpu_custom_call.1
$region0: #{tpu_custom_call.1}
  #allocation0 [shape = 'u32[]', space=smem, size = 0x4, offset = 0x4, fixed_abs, tag = 'smem constant byte address 0x4 - core index']
  #allocation1 [shape = 'u32[72,128]{1,0:T(1,128)}', space=vmem, size = 0x9000, scoped, tag = 'internal scratch']
  %s0 = inlined_call_operand.vmem [shape: f32[16,32], index: 0, kind: input, shape index: {}]
  %s1 = inlined_call_operand.vmem [shape: f32[32,128], index: 1, kind: input, shape index: {}]
  %s2 = inlined_call_operand.vmem [shape: f32[1,128], index: 2, kind: input, shape index: {}]
  %s3 = inlined_call_operand.vmem [shape: f32[128,32], index: 3, kind: input, shape index: {}]
  %s4 = inlined_call_operand.vmem [shape: f32[1,32], index: 4, kind: input, shape index: {}]
  %s5 = inlined_call_operand.hbm [shape: f32[16,32], index: 5, kind: output, shape index: {}]
  %s6 = sld [smem:[#allocation0]]
  $region30: #{tpu_custom_call.1} parent=0
    _
  %s8 = ssub.s32 1, %s6
  %s9 = scalar_select 0, %s8, %s6
  $region1: #{tpu_custom_call.1} parent=0
    #allocation2 [shape = 'u8[8192]{0}', space=vmem, size = 0x2000, scoped, tag = 'output window, operand 0, single buffered']
    #allocation3 [shape = 's32[1]{0}', space=sflag, size = 0x4, scoped, tag = 'scoped memory for tpu_custom_call.1']
    %10 = vsyncpa [#allocation3], 0
    // Predicated region
    $region2: #{tpu_custom_call.1} parent=1 // pred_check
      _
    $region3: #{tpu_custom_call.1} parent=1 // pred_check_branch
      %12 = sbr.rel (0) target = $region5
    $region4: #{tpu_custom_call.1} parent=1 // pred_region
      _
    $region5: #{tpu_custom_call.1} parent=1 // pred_fallthru
      _
    // Predicated region
    $region6: #{tpu_custom_call.1} parent=1 // pred_check
      _
    $region7: #{tpu_custom_call.1} parent=1 // pred_check_branch
      %14 = sbr.rel (0) target = $region9
    $region8: #{tpu_custom_call.1} parent=1 // pred_region
      _
    $region9: #{tpu_custom_call.1} parent=1 // pred_fallthru
      _
    // Predicated region
    $region10: #{tpu_custom_call.1} parent=1 // pred_check
      _
    $region11: #{tpu_custom_call.1} parent=1 // pred_check_branch
      %16 = sbr.rel (0) target = $region13
    $region12: #{tpu_custom_call.1} parent=1 // pred_region
      _
    $region13: #{tpu_custom_call.1} parent=1 // pred_fallthru
      _
    // Predicated region
    $region14: #{tpu_custom_call.1} parent=1 // pred_check
      _
    $region15: #{tpu_custom_call.1} parent=1 // pred_check_branch
      %18 = sbr.rel (0) target = $region17
    $region16: #{tpu_custom_call.1} parent=1 // pred_region
      _
    $region17: #{tpu_custom_call.1} parent=1 // pred_fallthru
      _
    // Predicated region
    $region18: #{tpu_custom_call.1} parent=1 // pred_check
      _
    $region19: #{tpu_custom_call.1} parent=1 // pred_check_branch
      %20 = sbr.rel (0) target = $region21
    $region20: #{tpu_custom_call.1} parent=1 // pred_region
      _
    $region21: #{tpu_custom_call.1} parent=1 // pred_fallthru
      _
    %v21 = vld [vmem:[%s0] sm:$0xff]
    %v22 = vld [vmem:[%s0 + $0x8] sm:$0xff]
    %v23 = vld [vmem:[%s1] sm:$0xff]
    %v24 = vld [vmem:[%s1 + $0x8] sm:$0xff]
    %v25 = vld [vmem:[%s1 + $0x10] sm:$0xff]
    %v26 = vld [vmem:[%s1 + $0x18] sm:$0xff]
    %v27 = vld [vmem:[%s2] sm:$0x1]
    %v29 = vperm.slane %v27, 0
    %vm31 = vcmask 261120
    %v33 = vsel %vm31, %v21, 0
    %v36 = vsel %vm31, %v22, 0
    %38 = vmatpush.msra.mxu0 0.0
    %39 = vmatpush.msra.mxu0 0.0
    %40 = vmatpush.msra.mxu0 0.0
    %41 = vmatpush.msra.mxu0 0.0
    %42 = vmatpush.msra.mxu0 0.0
    %43 = vmatpush.msra.mxu0 0.0
    %44 = vmatpush.msra.mxu0 0.0
    %45 = vmatpush.msra.mxu0 0.0
    %46 = vmatpush.msra.mxu0 0.0
    %47 = vmatpush.msra.mxu0 0.0
    %48 = vmatpush.msra.mxu0 0.0
    %49 = vmatpush.msra.mxu0 0.0
    %50 = vmatpush.msra.mxu0 %v26
    %51 = vmatpush.msra.mxu0 %v25
    %52 = vmatpush.msra.mxu0 %v24
    %53 = vmatpush.msra.mxu0 %v23
    %54 = vmatmul.f32.gmra.mxu0 %v33
    %v55 = vpop.f32.mrf.mxu0
    %v56 = vadd.f32 %v29, %v55
    %57 = vmatmul.f32.gmra.mxu0 %v36
    %v58 = vpop.f32.mrf.mxu0
    %v59 = vadd.f32 %v29, %v58
    %60 = vdwg.mxu0
    %v61 = vmax.f32 %v56, 0.0
    %v62 = vmax.f32 %v59, 0.0
    %v63 = vld [vmem:[%s3] sm:$0xff]
    %v64 = vld [vmem:[%s3 + $0x8] sm:$0xff]
    %v65 = vld [vmem:[%s3 + $0x10] sm:$0xff]
    %v66 = vld [vmem:[%s3 + $0x18] sm:$0xff]
    %v67 = vld [vmem:[%s3 + $0x20] sm:$0xff]
    %v68 = vld [vmem:[%s3 + $0x28] sm:$0xff]
    %v69 = vld [vmem:[%s3 + $0x30] sm:$0xff]
    %v70 = vld [vmem:[%s3 + $0x38] sm:$0xff]
    %v71 = vld [vmem:[%s3 + $0x40] sm:$0xff]
    %v72 = vld [vmem:[%s3 + $0x48] sm:$0xff]
    %v73 = vld [vmem:[%s3 + $0x50] sm:$0xff]
    %v74 = vld [vmem:[%s3 + $0x58] sm:$0xff]
    %v75 = vld [vmem:[%s3 + $0x60] sm:$0xff]
    %v76 = vld [vmem:[%s3 + $0x68] sm:$0xff]
    %v77 = vld [vmem:[%s3 + $0x70] sm:$0xff]
    %v78 = vld [vmem:[%s3 + $0x78] sm:$0xff]
    %v79 = vld [vmem:[%s4] sm:$0x1]
    %v81 = vperm.slane %v79, 0
    %83 = vmatpush.msra.mxu0 %v78
    %84 = vmatpush.msra.mxu0 %v77
    %85 = vmatpush.msra.mxu0 %v76
    %86 = vmatpush.msra.mxu0 %v75
    %87 = vmatpush.msra.mxu0 %v74
    %88 = vmatpush.msra.mxu0 %v73
    %89 = vmatpush.msra.mxu0 %v72
    %90 = vmatpush.msra.mxu0 %v71
    %91 = vmatpush.msra.mxu0 %v70
    %92 = vmatpush.msra.mxu0 %v69
    %93 = vmatpush.msra.mxu0 %v68
    %94 = vmatpush.msra.mxu0 %v67
    %95 = vmatpush.msra.mxu0 %v66
    %96 = vmatpush.msra.mxu0 %v65
    %97 = vmatpush.msra.mxu0 %v64
    %98 = vmatpush.msra.mxu0 %v63
    %99 = vmatmul.f32.gmra.mxu0 %v61
    %v100 = vpop.f32.mrf.mxu0
    %v101 = vadd.f32 %v81, %v100
    %102 = vmatmul.f32.gmra.mxu0 %v62
    %v103 = vpop.f32.mrf.mxu0
    %v104 = vadd.f32 %v81, %v103
    %105 = vdwg.mxu0
    %v106 = vxor.u32 %v101, 2147483648
    %v107 = vxor.u32 %v104, 2147483648
    %v108 = vmul.f32 %v106, 1.442695
    %v109 = vpow.pop %v108
    %v110 = vmul.f32 %v107, 1.442695
    %v111 = vpow.pop %v110
    %v112 = vadd.f32 %v109, 1.0
    %v113 = vadd.f32 %v111, 1.0
    %v114 = vrcp.pop %v112
    %v115 = vmul.f32 %v112, %v114
    %v116 = vsub.f32 1.0, %v115
    %v117 = vmul.f32 %v114, %v116
    %v118 = vadd.f32 %v114, %v117
    %vm119 = vweird.f32 %v112
    %vm120 = vweird.f32 %v114
    %vm121 = vmor %vm119, %vm120
    %v122 = vsel %vm121, %v114, %v118
    %v123 = vand.u32 2147483647, %v112
    %vm124 = vcmp.eq.f32.partialorder %v123, 8.507059e+37
    %v125 = vand.u32 %v112, 2147483648
    %v126 = vor.u32 1.1754944e-38, %v125
    %v127 = vsel %vm124, %v126, %v122
    %v128 = vmul.f32 1.0, %v127
    %v129 = vrcp.pop %v113
    %v130 = vmul.f32 %v113, %v129
    %v131 = vsub.f32 1.0, %v130
    %v132 = vmul.f32 %v129, %v131
    %v133 = vadd.f32 %v129, %v132
    %vm134 = vweird.f32 %v113
    %vm135 = vweird.f32 %v129
    %vm136 = vmor %vm134, %vm135
    %v137 = vsel %vm136, %v129, %v133
    %v138 = vand.u32 2147483647, %v113
    %vm139 = vcmp.eq.f32.partialorder %v138, 8.507059e+37
    %v140 = vand.u32 %v113, 2147483648
    %v141 = vor.u32 1.1754944e-38, %v140
    %v142 = vsel %vm139, %v141, %v137
    %v143 = vmul.f32 1.0, %v142
    %v144 = vmul.f32 %v21, %v128
    %v145 = vmul.f32 %v22, %v143
    %146 = vst.msk [vmem:[#allocation2] sm:$0xff] %vm31, %v144
    %147 = vst.msk [vmem:[#allocation2 + $0x8] sm:$0xff] %vm31, %v145
    // Predicated region
    $region22: #{tpu_custom_call.1} parent=1 // pred_check
      _
    $region23: #{tpu_custom_call.1} parent=1 // pred_check_branch
      %149 = sbr.rel (0) target = $region25
    $region24: #{tpu_custom_call.1} parent=1 // pred_region
      %151 = vsyncadd [#allocation3], 0
      %s152 = sshll.u32 [#allocation2], 4
      %s153 = int_to_ptr.vmem [resolvable:$true] %s152
      %s154 = sshll.u32 %s5, 4
      %s155 = int_to_ptr.hbm [resolvable:$true] %s154
      %160 = dma.vmem_to_hbm [thread:$0]  %s153, 256, %s155, [#allocation3], 128, 128, 8
    $region25: #{tpu_custom_call.1} parent=1 // pred_fallthru
      _
    // Predicated region
    $region26: #{tpu_custom_call.1} parent=1 // pred_check
      _
    $region27: #{tpu_custom_call.1} parent=1 // pred_check_branch
      %162 = sbr.rel (0) target = $region29
    $region28: #{tpu_custom_call.1} parent=1 // pred_region
      %164 = dma.done [#allocation3], 256
    $region29: #{tpu_custom_call.1} parent=1 // pred_fallthru
      _
    %165 = vsyncpa [#allocation3], 1

// kernel: tpu_custom_call.1
$region0: #{tpu_custom_call.1}
  #allocation0 [shape = 'u32[]', space=smem, size = 0x4, offset = 0x4, fixed_abs, tag = 'smem constant byte address 0x4 - core index']
  #allocation1 [shape = 'u32[72,128]{1,0:T(1,128)}', space=vmem, size = 0x9000, scoped, tag = 'internal scratch']
  %s0 = inlined_call_operand.vmem [shape: f32[16,32], index: 0, kind: input, shape index: {}]
  %s1 = inlined_call_operand.vmem [shape: f32[32,128], index: 1, kind: input, shape index: {}]
  %s2 = inlined_call_operand.vmem [shape: f32[1,128], index: 2, kind: input, shape index: {}]
  %s3 = inlined_call_operand.vmem [shape: f32[128,32], index: 3, kind: input, shape index: {}]
  %s4 = inlined_call_operand.vmem [shape: f32[1,32], index: 4, kind: input, shape index: {}]
  %s5 = inlined_call_operand.hbm [shape: f32[16,32], index: 5, kind: output, shape index: {}]
  %s6 = sld [smem:[#allocation0]]
  $region30: #{tpu_custom_call.1} parent=0
    _
  %s8 = ssub.s32 1, %s6
  %s9 = scalar_select 0, %s8, %s6
  $region1: #{tpu_custom_call.1} parent=0
    #allocation2 [shape = 'u8[8192]{0}', space=vmem, size = 0x2000, scoped, tag = 'output window, operand 0, single buffered']
    #allocation3 [shape = 's32[1]{0}', space=sflag, size = 0x4, scoped, tag = 'scoped memory for tpu_custom_call.1']
    %10 = vsyncpa [#allocation3], 0
    // Predicated region
    $region2: #{tpu_custom_call.1} parent=1 // pred_check
      _
    $region3: #{tpu_custom_call.1} parent=1 // pred_check_branch
      %12 = sbr.rel (0) target = $region5
    $region4: #{tpu_custom_call.1} parent=1 // pred_region
      _
    $region5: #{tpu_custom_call.1} parent=1 // pred_fallthru
      _
    // Predicated region
    $region6: #{tpu_custom_call.1} parent=1 // pred_check
      _
    $region7: #{tpu_custom_call.1} parent=1 // pred_check_branch
      %14 = sbr.rel (0) target = $region9
    $region8: #{tpu_custom_call.1} parent=1 // pred_region
      _
    $region9: #{tpu_custom_call.1} parent=1 // pred_fallthru
      _
    // Predicated region
    $region10: #{tpu_custom_call.1} parent=1 // pred_check
      _
    $region11: #{tpu_custom_call.1} parent=1 // pred_check_branch
      %16 = sbr.rel (0) target = $region13
    $region12: #{tpu_custom_call.1} parent=1 // pred_region
      _
    $region13: #{tpu_custom_call.1} parent=1 // pred_fallthru
      _
    // Predicated region
    $region14: #{tpu_custom_call.1} parent=1 // pred_check
      _
    $region15: #{tpu_custom_call.1} parent=1 // pred_check_branch
      %18 = sbr.rel (0) target = $region17
    $region16: #{tpu_custom_call.1} parent=1 // pred_region
      _
    $region17: #{tpu_custom_call.1} parent=1 // pred_fallthru
      _
    // Predicated region
    $region18: #{tpu_custom_call.1} parent=1 // pred_check
      _
    $region19: #{tpu_custom_call.1} parent=1 // pred_check_branch
      %20 = sbr.rel (0) target = $region21
    $region20: #{tpu_custom_call.1} parent=1 // pred_region
      _
    $region21: #{tpu_custom_call.1} parent=1 // pred_fallthru
      _
    %v21 = vld [vmem:[%s0] sm:$0xff]
    %v22 = vld [vmem:[%s0 + $0x8] sm:$0xff]
    %v23 = vld [vmem:[%s1] sm:$0xff]
    %v24 = vld [vmem:[%s1 + $0x8] sm:$0xff]
    %v25 = vld [vmem:[%s1 + $0x10] sm:$0xff]
    %v26 = vld [vmem:[%s1 + $0x18] sm:$0xff]
    %v27 = vld [vmem:[%s2] sm:$0x1]
    %v29 = vperm.slane %v27, 0
    %vm31 = vcmask 261120
    %v33 = vsel %vm31, %v21, 0
    %v36 = vsel %vm31, %v22, 0
    %38 = vmatpush.msra.mxu0 0.0
    %39 = vmatpush.msra.mxu0 0.0
    %40 = vmatpush.msra.mxu0 0.0
    %41 = vmatpush.msra.mxu0 0.0
    %42 = vmatpush.msra.mxu0 0.0
    %43 = vmatpush.msra.mxu0 0.0
    %44 = vmatpush.msra.mxu0 0.0
    %45 = vmatpush.msra.mxu0 0.0
    %46 = vmatpush.msra.mxu0 0.0
    %47 = vmatpush.msra.mxu0 0.0
    %48 = vmatpush.msra.mxu0 0.0
    %49 = vmatpush.msra.mxu0 0.0
    %50 = vmatpush.msra.mxu0 %v26
    %51 = vmatpush.msra.mxu0 %v25
    %52 = vmatpush.msra.mxu0 %v24
    %53 = vmatpush.msra.mxu0 %v23
    %54 = vmatmul.f32.gmra.mxu0 %v33
    %v55 = vpop.f32.mrf.mxu0
    %v56 = vadd.f32 %v29, %v55
    %57 = vmatmul.f32.gmra.mxu0 %v36
    %v58 = vpop.f32.mrf.mxu0
    %v59 = vadd.f32 %v29, %v58
    %60 = vdwg.mxu0
    %v61 = vmax.f32 %v56, 0.0
    %v62 = vmax.f32 %v59, 0.0
    %v63 = vld [vmem:[%s3] sm:$0xff]
    %v64 = vld [vmem:[%s3 + $0x8] sm:$0xff]
    %v65 = vld [vmem:[%s3 + $0x10] sm:$0xff]
    %v66 = vld [vmem:[%s3 + $0x18] sm:$0xff]
    %v67 = vld [vmem:[%s3 + $0x20] sm:$0xff]
    %v68 = vld [vmem:[%s3 + $0x28] sm:$0xff]
    %v69 = vld [vmem:[%s3 + $0x30] sm:$0xff]
    %v70 = vld [vmem:[%s3 + $0x38] sm:$0xff]
    %v71 = vld [vmem:[%s3 + $0x40] sm:$0xff]
    %v72 = vld [vmem:[%s3 + $0x48] sm:$0xff]
    %v73 = vld [vmem:[%s3 + $0x50] sm:$0xff]
    %v74 = vld [vmem:[%s3 + $0x58] sm:$0xff]
    %v75 = vld [vmem:[%s3 + $0x60] sm:$0xff]
    %v76 = vld [vmem:[%s3 + $0x68] sm:$0xff]
    %v77 = vld [vmem:[%s3 + $0x70] sm:$0xff]
    %v78 = vld [vmem:[%s3 + $0x78] sm:$0xff]
    %v79 = vld [vmem:[%s4] sm:$0x1]
    %v81 = vperm.slane %v79, 0
    %83 = vmatpush.msra.mxu0 %v78
    %84 = vmatpush.msra.mxu0 %v77
    %85 = vmatpush.msra.mxu0 %v76
    %86 = vmatpush.msra.mxu0 %v75
    %87 = vmatpush.msra.mxu0 %v74
    %88 = vmatpush.msra.mxu0 %v73
    %89 = vmatpush.msra.mxu0 %v72
    %90 = vmatpush.msra.mxu0 %v71
    %91 = vmatpush.msra.mxu0 %v70
    %92 = vmatpush.msra.mxu0 %v69
    %93 = vmatpush.msra.mxu0 %v68
    %94 = vmatpush.msra.mxu0 %v67
    %95 = vmatpush.msra.mxu0 %v66
    %96 = vmatpush.msra.mxu0 %v65
    %97 = vmatpush.msra.mxu0 %v64
    %98 = vmatpush.msra.mxu0 %v63
    %99 = vmatmul.f32.gmra.mxu0 %v61
    %v100 = vpop.f32.mrf.mxu0
    %v101 = vadd.f32 %v81, %v100
    %102 = vmatmul.f32.gmra.mxu0 %v62
    %v103 = vpop.f32.mrf.mxu0
    %v104 = vadd.f32 %v81, %v103
    %105 = vdwg.mxu0
    %v106 = vxor.u32 %v101, 2147483648
    %v107 = vxor.u32 %v104, 2147483648
    %v108 = vmul.f32 %v106, 1.442695
    %v109 = vpow.pop %v108
    %v110 = vmul.f32 %v107, 1.442695
    %v111 = vpow.pop %v110
    %v112 = vadd.f32 %v109, 1.0
    %v113 = vadd.f32 %v111, 1.0
    %v114 = vrcp.pop %v112
    %v115 = vmul.f32 %v112, %v114
    %v116 = vsub.f32 1.0, %v115
    %v117 = vmul.f32 %v114, %v116
    %v118 = vadd.f32 %v114, %v117
    %vm119 = vweird.f32 %v112
    %vm120 = vweird.f32 %v114
    %vm121 = vmor %vm119, %vm120
    %v122 = vsel %vm121, %v114, %v118
    %v123 = vand.u32 2147483647, %v112
    %vm124 = vcmp.eq.f32.partialorder %v123, 8.507059e+37
    %v125 = vand.u32 %v112, 2147483648
    %v126 = vor.u32 1.1754944e-38, %v125
    %v127 = vsel %vm124, %v126, %v122
    %v128 = vmul.f32 1.0, %v127
    %v129 = vrcp.pop %v113
    %v130 = vmul.f32 %v113, %v129
    %v131 = vsub.f32 1.0, %v130
    %v132 = vmul.f32 %v129, %v131
    %v133 = vadd.f32 %v129, %v132
    %vm134 = vweird.f32 %v113
    %vm135 = vweird.f32 %v129
    %vm136 = vmor %vm134, %vm135
    %v137 = vsel %vm136, %v129, %v133
    %v138 = vand.u32 2147483647, %v113
    %vm139 = vcmp.eq.f32.partialorder %v138, 8.507059e+37
    %v140 = vand.u32 %v113, 2147483648
    %v141 = vor.u32 1.1754944e-38, %v140
    %v142 = vsel %vm139, %v141, %v137
    %v143 = vmul.f32 1.0, %v142
    %v144 = vmul.f32 %v21, %v128
    %v145 = vmul.f32 %v22, %v143
    %146 = vst.msk [vmem:[#allocation2] sm:$0xff] %vm31, %v144
    %147 = vst.msk [vmem:[#allocation2 + $0x8] sm:$0xff] %vm31, %v145
    // Predicated region
    $region22: #{tpu_custom_call.1} parent=1 // pred_check
      _
    $region23: #{tpu_custom_call.1} parent=1 // pred_check_branch
      %149 = sbr.rel (0) target = $region25
    $region24: #{tpu_custom_call.1} parent=1 // pred_region
      %151 = vsyncadd [#allocation3], 0
      %s152 = sshll.u32 [#allocation2], 4
      %s153 = int_to_ptr.vmem [resolvable:$true] %s152
      %s154 = sshll.u32 %s5, 4
      %s155 = int_to_ptr.hbm [resolvable:$true] %s154
      %160 = dma.vmem_to_hbm [thread:$0]  %s153, 256, %s155, [#allocation3], 128, 128, 8
    $region25: #{tpu_custom_call.1} parent=1 // pred_fallthru
      _
    // Predicated region
    $region26: #{tpu_custom_call.1} parent=1 // pred_check
      _
    $region27: #{tpu_custom_call.1} parent=1 // pred_check_branch
      %162 = sbr.rel (0) target = $region29
    $region28: #{tpu_custom_call.1} parent=1 // pred_region
      %164 = dma.done [#allocation3], 256
    $region29: #{tpu_custom_call.1} parent=1 // pred_fallthru
      _
    %165 = vsyncpa [#allocation3], 1

</llo_original>
